<compile_context>
chip_gen: v6e
topology: v6e:2x2x1
jax: 0.10.0
libtpu: 0.0.40
codegen_flags: <defaults>
</compile_context>

<pallas_src>
import functools

import jax
import jax.numpy as jnp
from jax import lax
from jax.experimental import pallas as pl
from jax.experimental.pallas import tpu as pltpu


# ----------------------------------------------------------------------------
# VMEM-aware block planning
# ----------------------------------------------------------------------------
def _vmem_capacity_bytes():
    """Physical per-core VMEM; falls back to the v7x 64 MiB lower bound."""
    try:
        cap = int(getattr(pltpu.get_tpu_info(), "vmem_capacity_bytes", 0))
        if cap > 0:
            return cap
    except Exception:
        pass
    return 64 * 1024 * 1024


def _plan_block_batch(batch, per_example_bytes, fixed_bytes):
    """Pick the per-grid-step batch tile TB and the scoped-VMEM limit.

    The budget counts everything resident (double-buffered bf16 token blocks,
    masks, cls/out rows, f32 temporaries) plus the broadcast weight blocks,
    not just the token block.  Large batches keep >= 4 grid steps so that
    megacore sharding of the "parallel" batch axis leaves >= 2 pipelined steps
    per TensorCore (v7x); small batches just take the whole batch (grid=1).
    """
    cap = _vmem_capacity_bytes()
    vmem_limit = int(cap * 0.75)                      # headroom for Mosaic scratch
    budget = vmem_limit - fixed_bytes - (2 << 20)
    tb_max = max(1, budget // max(per_example_bytes, 1))

    if batch >= 64:
        min_steps = 4            # 2 TensorCores x >= 2 steps each (v7x)
    elif batch >= 16:
        min_steps = 2
    else:
        min_steps = 1
    tb = min(tb_max, pl.cdiv(batch, min_steps), 1024)

    if tb >= batch:
        return batch, vmem_limit

    align = 16                                        # bf16 sublane tiling of (TB, D) blocks
    tb = (tb // align) * align
    if tb == 0:
        tb = min(align, batch)                        # tiny-VMEM fallback
    tb = min(tb, batch)
    # make sure the scoped limit covers whatever we ended up choosing
    needed = fixed_bytes + tb * per_example_bytes + (2 << 20)
    vmem_limit = min(cap, max(vmem_limit, needed))
    return tb, vmem_limit


# ----------------------------------------------------------------------------
# Pallas kernels
# ----------------------------------------------------------------------------
def _use_kernel(tok_ref, cls_ref, keep_ref, len_ref, w1_ref, w2_ref, b_ref,
                out_ref, *, use_ctx):
    # tok_ref : (TB, S-1, D)  bf16 token embeddings (output[:, 1:])
    # cls_ref : (TB, D)       bf16 CLS embeddings   (output[:, 0])
    # keep_ref: (TB, 1, S-1)  bf16 keep mask (1 = valid token)
    # len_ref : (TB, 1)       f32 sentence lengths
    # w1_ref  : (D, D) bf16   merge weight rows for `sent`
    # w2_ref  : (D, D) bf16   merge weight rows for `cls`
    # b_ref   : (1, D) bf16   merge bias
    tok = tok_ref[...]                                   # bf16, no full-block upcast
    keep = keep_ref[...]                                 # bf16 {0,1}

    # Masked token sum as a bf16 x bf16 MXU contraction with f32 accumulation.
    # (Per-example M=1 pushes stay hidden under the token-block DMA; see header.)
    summed = jnp.einsum("bks,bsd->bkd", keep, tok,
                        preferred_element_type=jnp.float32)        # (TB, 1, D) f32
    summed = summed.reshape(summed.shape[0], summed.shape[2])      # (TB, D)

    # sent = sum / sqrt(sent_len)  -- EUP rsqrt.
    # TODO(synk): sent_len == 0 still yields inf/NaN, matching the original module.
    sent = summed * lax.rsqrt(len_ref[...])                        # (TB, D) f32

    if use_ctx:
        # Split K=2D projection into two K=D MXU dots: no (TB, 2D) concat temp.
        sent = (jnp.dot(sent.astype(jnp.bfloat16), w1_ref[...],
                        preferred_element_type=jnp.float32)
                + jnp.dot(cls_ref[...], w2_ref[...],
                          preferred_element_type=jnp.float32)
                + b_ref[...])

    out_ref[...] = sent.astype(out_ref.dtype)


def _attn_kernel(tok_ref, cls_ref, keep_ref, w_ref, b_ref, out_ref):
    # TODO(synk): original torch.bmm(attn_proj(cls).unsqueeze(1), token_embed)
    # only type-checks when dim_size == seq_len-1; we keep the intended
    # q . token^T attention-pooling semantics.
    # tok_ref : (TB, S-1, D) bf16 ; cls_ref : (TB, D) bf16
    # keep_ref: (TB, 1, S-1) bf16 ; w_ref: (D, D) bf16 ; b_ref: (1, D) bf16
    tok = tok_ref[...]                                   # bf16, native layout
    cls = cls_ref[...]                                   # bf16
    keep = keep_ref[...]                                 # bf16 {0,1}

    # Batched q projection: bf16 MXU dot, f32 accumulate.
    q = jnp.dot(cls, w_ref[...],
                preferred_element_type=jnp.float32) + b_ref[...]   # (TB, D) f32
    q3 = q.astype(jnp.bfloat16).reshape(q.shape[0], 1, q.shape[1]) # (TB, 1, D)

    # Attention scores: contract over hidden dim, batched over examples.
    # TODO(synk): if pl.lower_as_mlir shows a per-example vxpose of the (S-1,D)
    # tok tile for this contraction, flip to "bsd,bkd->bsk" + a small scores
    # relayout so the big operand keeps its native layout.
    scores = jnp.einsum("bkd,bsd->bks", q3, tok,
                        preferred_element_type=jnp.float32)        # (TB, 1, S-1)

    # Finite fill value: avoids NaN when an example's token row is fully masked.
    scores = jnp.where(keep > 0, scores, jnp.float32(-1e30))
    m = jnp.max(scores, axis=-1, keepdims=True)                    # (TB, 1, 1)
    e = jnp.exp(scores - m)
    denom = jnp.sum(e, axis=-1, keepdims=True)
    probs = (e / denom).astype(jnp.bfloat16)        # exact divide (no approx recip)

    ctx = jnp.einsum("bks,bsd->bkd", probs, tok,
                     preferred_element_type=jnp.float32)           # (TB, 1, D)
    ctx = ctx.reshape(ctx.shape[0], ctx.shape[2])                  # (TB, D)

    out_ref[...] = ((cls.astype(jnp.float32) + ctx) * 0.5).astype(out_ref.dtype)


# ----------------------------------------------------------------------------
# Wrappers around pallas_call
# ----------------------------------------------------------------------------
def use_embedding_pallas(token_embed, cls_embed, token_keep, sent_lens,
                         merge_w1, merge_w2, merge_b2, *,
                         use_context_vector=True):
    B, Sm1, D = token_embed.shape

    # Everything resident per example (bytes): 2x bf16 tok buffers, 2x mask rows
    # (8-sublane padded), 2x bf16 cls + 2x f32 out rows, f32 einsum result and
    # projection temporaries.
    per_ex = 4 * Sm1 * D + 32 * Sm1 + 12 * D + 64 * D + 2048
    fixed = 2 * (2 * D * D * 2 + 2 * D)          # two (D,D) bf16 weights + bias
    TB, vmem_limit = _plan_block_batch(B, per_ex, fixed)
    grid = (pl.cdiv(B, TB),)

    keep3 = token_keep.astype(jnp.bfloat16).reshape(B, 1, Sm1)   # bf16 keep mask
    lens2 = sent_lens.astype(jnp.float32).reshape(B, 1)

    kernel = functools.partial(_use_kernel, use_ctx=use_context_vector)
    return pl.pallas_call(
        kernel,
        out_shape=jax.ShapeDtypeStruct((B, D), jnp.float32),
        grid=grid,
        in_specs=[
            pl.BlockSpec((TB, Sm1, D), lambda i: (i, 0, 0)),
            pl.BlockSpec((TB, D), lambda i: (i, 0)),
            pl.BlockSpec((TB, 1, Sm1), lambda i: (i, 0, 0)),
            pl.BlockSpec((TB, 1), lambda i: (i, 0)),
            pl.BlockSpec((D, D), lambda i: (0, 0)),
            pl.BlockSpec((D, D), lambda i: (0, 0)),
            pl.BlockSpec((1, D), lambda i: (0, 0)),
        ],
        out_specs=pl.BlockSpec((TB, D), lambda i: (i, 0)),
        compiler_params=pltpu.CompilerParams(
            dimension_semantics=("parallel",),
            vmem_limit_bytes=vmem_limit),
    )(token_embed, cls_embed, keep3, lens2, merge_w1, merge_w2, merge_b2)


def attention_embedding_pallas(token_embed, cls_embed, token_keep,
                               attn_w_t, attn_b2):
    B, Sm1, D = token_embed.shape

    per_ex = 4 * Sm1 * D + 32 * Sm1 + 12 * D + 64 * D + 160 * Sm1 + 2048
    fixed = 2 * (D * D * 2 + 2 * D)              # (D,D) bf16 weight + bias
    TB, vmem_limit = _plan_block_batch(B, per_ex, fixed)
    grid = (pl.cdiv(B, TB),)

    keep3 = token_keep.astype(jnp.bfloat16).reshape(B, 1, Sm1)

    return pl.pallas_call(
        _attn_kernel,
        out_shape=jax.ShapeDtypeStruct((B, D), jnp.float32),
        grid=grid,
        in_specs=[
            pl.BlockSpec((TB, Sm1, D), lambda i: (i, 0, 0)),
            pl.BlockSpec((TB, D), lambda i: (i, 0)),
            pl.BlockSpec((TB, 1, Sm1), lambda i: (i, 0, 0)),
            pl.BlockSpec((D, D), lambda i: (0, 0)),
            pl.BlockSpec((1, D), lambda i: (0, 0)),
        ],
        out_specs=pl.BlockSpec((TB, D), lambda i: (i, 0)),
        compiler_params=pltpu.CompilerParams(
            dimension_semantics=("parallel",),
            vmem_limit_bytes=vmem_limit),
    )(token_embed, cls_embed, keep3, attn_w_t, attn_b2)


# ----------------------------------------------------------------------------
# PlmModel (JAX / Pallas port)
# ----------------------------------------------------------------------------
class PlmModelPallas:
    def __init__(self, dim_size, embed_mode="USE", use_context_vector=True,
                 vocab_size=100, seed=0):
        self.dim_size = dim_size
        self.embed_mode = embed_mode
        self.use_context_vector = use_context_vector

        key = jax.random.PRNGKey(seed)
        k_emb, k_aw, k_ab, k_mw, k_mb = jax.random.split(key, 5)

        # TODO(synk): the pretrained transformer from load_plm_model() is not
        # reimplemented; its contextual hidden states are replaced by a
        # deterministic synthetic bf16 embedding-table lookup (plain-JAX glue).
        self.embed_table = (0.02 * jax.random.normal(
            k_emb, (vocab_size, dim_size), dtype=jnp.float32)).astype(jnp.bfloat16)

        # nn.Linear(dim, dim)  -> weight (out, in), bias (out,)
        ba = 1.0 / jnp.sqrt(jnp.float32(dim_size))
        attn_w = jax.random.uniform(k_aw, (dim_size, dim_size),
                                    minval=-ba, maxval=ba, dtype=jnp.float32)
        attn_b = jax.random.uniform(k_ab, (dim_size,),
                                    minval=-ba, maxval=ba, dtype=jnp.float32)
        # nn.Linear(2*dim, dim)
        bm = 1.0 / jnp.sqrt(jnp.float32(2 * dim_size))
        merge_w = jax.random.uniform(k_mw, (dim_size, 2 * dim_size),
                                     minval=-bm, maxval=bm, dtype=jnp.float32)
        merge_b = jax.random.uniform(k_mb, (dim_size,),
                                     minval=-bm, maxval=bm, dtype=jnp.float32)

        # Pre-transposed bf16 weights: half the VMEM/HBM weight footprint and
        # the MXU's native bf16 path (matters most under v7x's 64 MiB VMEM).
        self.attn_w_t = attn_w.T.astype(jnp.bfloat16)              # (D, D)
        self.attn_b2 = attn_b.reshape(1, dim_size).astype(jnp.bfloat16)
        self.attn_b = self.attn_b2.reshape(dim_size)               # for refs
        self.merge_w_t = merge_w.T.astype(jnp.bfloat16)            # (2D, D)
        self.merge_w1 = self.merge_w_t[:dim_size]                  # (D, D) sent rows
        self.merge_w2 = self.merge_w_t[dim_size:]                  # (D, D) cls rows
        self.merge_b2 = merge_b.reshape(1, dim_size).astype(jnp.bfloat16)
        self.merge_b = self.merge_b2.reshape(dim_size)             # for refs

    def _plm(self, token_ids, masks):
        # Stand-in for self.plm_model(input_ids=..., attention_mask=...)[0]
        return self.embed_table[token_ids]                         # (B, S, D) bf16

    def get_single_sent_embedding(self, token_ids, masks, sent_lens):
        hidden = self._plm(token_ids, masks)                       # (B, S, D) bf16
        cls_embed = hidden[:, 0, :]                                # (B, D)
        token_embed = hidden[:, 1:, :]                             # (B, S-1, D)
        token_keep = masks[:, 1:]                                  # (B, S-1) 1=valid

        if self.embed_mode == "USE":
            return use_embedding_pallas(
                token_embed, cls_embed, token_keep, sent_lens,
                self.merge_w1, self.merge_w2, self.merge_b2,
                use_context_vector=self.use_context_vector)
        elif self.embed_mode == "attention":
            return attention_embedding_pallas(
                token_embed, cls_embed, token_keep,
                self.attn_w_t, self.attn_b2)
        elif self.embed_mode == "CLS":
            return cls_embed
        else:
            raise ValueError("embed mode error")

    def forward(self, batch, prefix=None):
        if not prefix:
            token_field, mask_field, len_field = "tokens", "masks", "sent_lens"
        else:
            token_field = "{}_tokens".format(prefix)
            mask_field = "{}_masks".format(prefix)
            len_field = "{}_sent_lens".format(prefix)
        token_ids = batch[token_field]
        masks = batch[mask_field]
        sent_lens = batch[len_field]
        if isinstance(token_ids, list):
            return [self.get_single_sent_embedding(token_ids[i], masks[i],
                                                   sent_lens[i])
                    for i in range(len(token_ids))]
        return self.get_single_sent_embedding(token_ids, masks, sent_lens)


# ----------------------------------------------------------------------------
# Pure-JAX references (for correctness check)
# ----------------------------------------------------------------------------
def _use_ref(hidden32, masks, sent_lens, merge_w_t, merge_b, use_ctx):
    cls = hidden32[:, 0]
    tok = hidden32[:, 1:]
    keep = masks[:, 1:].astype(jnp.float32)[..., None]
    sent = (tok * keep).sum(1) / jnp.sqrt(sent_lens.astype(jnp.float32))[:, None]
    if use_ctx:
        sent = jnp.concatenate([sent, cls], axis=1) @ merge_w_t + merge_b
    return sent


def _attn_ref(hidden32, masks, attn_w_t, attn_b):
    cls = hidden32[:, 0]
    tok = hidden32[:, 1:]
    q = cls @ attn_w_t + attn_b
    scores = jnp.einsum("bd,bsd->bs", q, tok)
    scores = jnp.where(masks[:, 1:] > 0, scores, -jnp.inf)
    probs = jax.nn.softmax(scores, axis=-1)
    ctx = jnp.einsum("bs,bsd->bd", probs, tok)
    return (cls + ctx) * 0.5


if __name__ == "__main__":
    B, S, D, VOCAB = 2, 9, 128, 100

    key = jax.random.PRNGKey(0)
    k_tok, _ = jax.random.split(key)
    token_ids = jax.random.randint(k_tok, (B, S), 0, VOCAB, dtype=jnp.int32)

    # masks: 1 = valid token, 0 = padding (row 0 fully valid, row 1 padded)
    masks = jnp.array([[1] * S,
                       [1] * 6 + [0] * (S - 6)], dtype=jnp.int32)
    sent_lens = masks[:, 1:].sum(axis=1).astype(jnp.int32)   # (B,)

    batch = {"tokens": token_ids, "masks": masks, "sent_lens": sent_lens}

    # ---- USE mode ----
    model_use = PlmModelPallas(D, embed_mode="USE", use_context_vector=True,
                               vocab_size=VOCAB, seed=0)
    out_use = model_use.forward(batch)
    jax.block_until_ready(out_use)
    hidden32 = model_use._plm(token_ids, masks).astype(jnp.float32)
    ref_use = _use_ref(hidden32, masks, sent_lens,
                       model_use.merge_w_t, model_use.merge_b, True)
    assert out_use.shape == (B, D)
    assert jnp.allclose(out_use, ref_use, atol=2e-3, rtol=2e-3)

    # ---- attention mode ----
    model_attn = PlmModelPallas(D, embed_mode="attention", vocab_size=VOCAB,
                                seed=0)
    out_attn = model_attn.forward(batch)
    jax.block_until_ready(out_attn)
    ref_attn = _attn_ref(hidden32, masks, model_attn.attn_w_t, model_attn.attn_b)
    assert out_attn.shape == (B, D)
    assert jnp.allclose(out_attn, ref_attn, atol=2e-3, rtol=2e-3)

    # ---- CLS mode (trivial slice) ----
    model_cls = PlmModelPallas(D, embed_mode="CLS", vocab_size=VOCAB, seed=0)
    out_cls = model_cls.forward(batch)
    jax.block_until_ready(out_cls)
    assert out_cls.shape == (B, D)

    print("KERNEL_OK")
</pallas_src>

<mosaic_0001>
module attributes {stable_mosaic.version = 11 : i64} {
  func.func @_use_kernel(%arg0: i32, %arg1: memref<2x8x128xbf16, #tpu.memory_space<vmem>>, %arg2: memref<2x128xbf16, #tpu.memory_space<vmem>>, %arg3: memref<2x1x8xbf16, #tpu.memory_space<vmem>>, %arg4: memref<2x1xf32, #tpu.memory_space<vmem>>, %arg5: memref<128x128xbf16, #tpu.memory_space<vmem>>, %arg6: memref<128x128xbf16, #tpu.memory_space<vmem>>, %arg7: memref<1x128xbf16, #tpu.memory_space<vmem>>, %arg8: memref<2x128xf32, #tpu.memory_space<vmem>>) attributes {dimension_semantics = [#tpu.dimension_semantics<parallel>], iteration_bounds = array<i64: 1>, scalar_prefetch = 0 : i64, scratch_operands = 0 : i64, tpu.core_type = #tpu.core_type<tc>, window_params = [{transform_indices = @transform_0, window_bounds = array<i64: 2, 8, 128>}, {transform_indices = @transform_1, window_bounds = array<i64: 2, 128>}, {transform_indices = @transform_2, window_bounds = array<i64: 2, 1, 8>}, {transform_indices = @transform_3, window_bounds = array<i64: 2, 1>}, {pipeline_mode = #tpu.pipeline_mode<synchronous>, transform_indices = @transform_4, window_bounds = array<i64: 128, 128>}, {pipeline_mode = #tpu.pipeline_mode<synchronous>, transform_indices = @transform_5, window_bounds = array<i64: 128, 128>}, {pipeline_mode = #tpu.pipeline_mode<synchronous>, transform_indices = @transform_6, window_bounds = array<i64: 1, 128>}, {transform_indices = @transform_7, window_bounds = array<i64: 2, 128>}]} {
    %c0 = arith.constant 0 : index
    %c0_0 = arith.constant 0 : index
    %c0_1 = arith.constant 0 : index
    %0 = vector.load %arg1[%c0, %c0_0, %c0_1] : memref<2x8x128xbf16, #tpu.memory_space<vmem>>, vector<2x8x128xbf16>
    %c0_2 = arith.constant 0 : index
    %c0_3 = arith.constant 0 : index
    %c0_4 = arith.constant 0 : index
    %1 = vector.load %arg3[%c0_2, %c0_3, %c0_4] : memref<2x1x8xbf16, #tpu.memory_space<vmem>>, vector<2x1x8xbf16>
    "tpu.trace_start"() <{level = 10 : i32, message = "bks,bsd->bkd"}> : () -> ()
    %cst = arith.constant dense<0.000000e+00> : vector<2x1x128xf32>
    %2 = tpu.matmul %1, %0, %cst {dimension_numbers = #tpu.dot_dimension_numbers<[2], [1], [1], [2], [0, 0, 0, 1, 1, 2], [0], [0]>} : vector<2x1x8xbf16>, vector<2x8x128xbf16>, vector<2x1x128xf32> -> vector<2x1x128xf32>
    "tpu.trace_stop"() : () -> ()
    %3 = vector.shape_cast %2 : vector<2x1x128xf32> to vector<2x128xf32>
    %c0_5 = arith.constant 0 : index
    %c0_6 = arith.constant 0 : index
    %4 = vector.load %arg4[%c0_5, %c0_6] : memref<2x1xf32, #tpu.memory_space<vmem>>, vector<2x1xf32>
    %5 = math.rsqrt %4 : vector<2x1xf32>
    %6 = vector.broadcast %5 : vector<2x1xf32> to vector<2x128xf32>
    %7 = arith.mulf %3, %6 : vector<2x128xf32>
    %8 = arith.truncf %7 : vector<2x128xf32> to vector<2x128xbf16>
    %c0_7 = arith.constant 0 : index
    %c0_8 = arith.constant 0 : index
    %9 = vector.load %arg5[%c0_7, %c0_8] : memref<128x128xbf16, #tpu.memory_space<vmem>>, vector<128x128xbf16>
    %cst_9 = arith.constant dense<0.000000e+00> : vector<2x128xf32>
    %10 = tpu.matmul %8, %9, %cst_9 {dimension_numbers = #tpu.dot_dimension_numbers<[1], [0], [0], [1], [0, 0, 1, 1], [], []>} : vector<2x128xbf16>, vector<128x128xbf16>, vector<2x128xf32> -> vector<2x128xf32>
    %c0_10 = arith.constant 0 : index
    %c0_11 = arith.constant 0 : index
    %11 = vector.load %arg2[%c0_10, %c0_11] : memref<2x128xbf16, #tpu.memory_space<vmem>>, vector<2x128xbf16>
    %c0_12 = arith.constant 0 : index
    %c0_13 = arith.constant 0 : index
    %12 = vector.load %arg6[%c0_12, %c0_13] : memref<128x128xbf16, #tpu.memory_space<vmem>>, vector<128x128xbf16>
    %cst_14 = arith.constant dense<0.000000e+00> : vector<2x128xf32>
    %13 = tpu.matmul %11, %12, %cst_14 {dimension_numbers = #tpu.dot_dimension_numbers<[1], [0], [0], [1], [0, 0, 1, 1], [], []>} : vector<2x128xbf16>, vector<128x128xbf16>, vector<2x128xf32> -> vector<2x128xf32>
    %14 = arith.addf %10, %13 : vector<2x128xf32>
    %c0_15 = arith.constant 0 : index
    %c0_16 = arith.constant 0 : index
    %15 = vector.load %arg7[%c0_15, %c0_16] : memref<1x128xbf16, #tpu.memory_space<vmem>>, vector<1x128xbf16>
    %16 = arith.extf %15 : vector<1x128xbf16> to vector<1x128xf32>
    %17 = vector.broadcast %16 : vector<1x128xf32> to vector<2x128xf32>
    %18 = arith.addf %14, %17 : vector<2x128xf32>
    %c0_17 = arith.constant 0 : index
    %c0_18 = arith.constant 0 : index
    %19 = vector.load %arg8[%c0_17, %c0_18] : memref<2x128xf32, #tpu.memory_space<vmem>>, vector<2x128xf32>
    tpu.vector_store %arg8[%c0_17, %c0_18], %18 {strides = array<i32>} : memref<2x128xf32, #tpu.memory_space<vmem>>, vector<2x128xf32>,
    return
  }
  func.func @transform_0(%arg0: i32) -> (i32, i32, i32) {
    %c0_i32 = arith.constant 0 : i32
    %c0_i32_0 = arith.constant 0 : i32
    %c0_i32_1 = arith.constant 0 : i32
    return %arg0, %c0_i32, %c0_i32_0 : i32, i32, i32
  }
  func.func @transform_1(%arg0: i32) -> (i32, i32) {
    %c0_i32 = arith.constant 0 : i32
    %c0_i32_0 = arith.constant 0 : i32
    return %arg0, %c0_i32 : i32, i32
  }
  func.func @transform_2(%arg0: i32) -> (i32, i32, i32) {
    %c0_i32 = arith.constant 0 : i32
    %c0_i32_0 = arith.constant 0 : i32
    %c0_i32_1 = arith.constant 0 : i32
    return %arg0, %c0_i32, %c0_i32_0 : i32, i32, i32
  }
  func.func @transform_3(%arg0: i32) -> (i32, i32) {
    %c0_i32 = arith.constant 0 : i32
    %c0_i32_0 = arith.constant 0 : i32
    return %arg0, %c0_i32 : i32, i32
  }
  func.func @transform_4(%arg0: i32) -> (i32, i32) {
    %c0_i32 = arith.constant 0 : i32
    %c0_i32_0 = arith.constant 0 : i32
    %c0_i32_1 = arith.constant 0 : i32
    return %c0_i32, %c0_i32_0 : i32, i32
  }
  func.func @transform_5(%arg0: i32) -> (i32, i32) {
    %c0_i32 = arith.constant 0 : i32
    %c0_i32_0 = arith.constant 0 : i32
    %c0_i32_1 = arith.constant 0 : i32
    return %c0_i32, %c0_i32_0 : i32, i32
  }
  func.func @transform_6(%arg0: i32) -> (i32, i32) {
    %c0_i32 = arith.constant 0 : i32
    %c0_i32_0 = arith.constant 0 : i32
    %c0_i32_1 = arith.constant 0 : i32
    return %c0_i32, %c0_i32_0 : i32, i32
  }
  func.func @transform_7(%arg0: i32) -> (i32, i32) {
    %c0_i32 = arith.constant 0 : i32
    %c0_i32_0 = arith.constant 0 : i32
    return %arg0, %c0_i32 : i32, i32
  }
}

</mosaic_0001>

<llo_original>
// kernel: tpu_custom_call.1
$region0: #{tpu_custom_call.1}
  #allocation0 [shape = 'u32[]', space=smem, size = 0x4, offset = 0x4, fixed_abs, tag = 'smem constant byte address 0x4 - core index']
  #allocation1 [shape = 'u32[144,128]{1,0:T(1,128)}', space=vmem, size = 0x12000, scoped, tag = 'internal scratch']
  %s0 = inlined_call_operand.hbm [shape: bf16[2,8,128], index: 0, kind: input, shape index: {}]
  %s1 = inlined_call_operand.vmem [shape: bf16[2,128], index: 1, kind: input, shape index: {}]
  %s2 = inlined_call_operand.vmem [shape: bf16[2,1,8], index: 2, kind: input, shape index: {}]
  %s3 = inlined_call_operand.vmem [shape: f32[2,1], index: 3, kind: input, shape index: {}]
  %s4 = inlined_call_operand.hbm [shape: bf16[128,128], index: 4, kind: input, shape index: {}]
  %s5 = inlined_call_operand.hbm [shape: bf16[128,128], index: 5, kind: input, shape index: {}]
  %s6 = inlined_call_operand.vmem [shape: bf16[1,128], index: 6, kind: input, shape index: {}]
  %s7 = inlined_call_operand.hbm [shape: f32[2,128], index: 7, kind: output, shape index: {}]
  %s8 = sld [smem:[#allocation0]]
  $region50: #{tpu_custom_call.1} parent=0
    _
  %s10 = ssub.s32 1, %s8
  %s11 = scalar_select 0, %s10, %s8
  $region1: #{tpu_custom_call.1} parent=0
    #allocation2 [shape = 'u8[4096]{0}', space=vmem, size = 0x1000, scoped, tag = 'input window, operand 0, single buffered']
    #allocation3 [shape = 's32[1]{0}', space=sflag, size = 0x4, scoped, tag = 'scoped memory for tpu_custom_call.1']
    #allocation4 [shape = 's32[1]{0}', space=sflag, size = 0x4, scoped, tag = 'scoped memory for tpu_custom_call.1']
    #allocation5 [shape = 'u8[32768]{0}', space=vmem, size = 0x8000, scoped, tag = 'input window, operand 4, single buffered']
    #allocation6 [shape = 's32[1]{0}', space=sflag, size = 0x4, scoped, tag = 'scoped memory for tpu_custom_call.1']
    #allocation7 [shape = 'u8[32768]{0}', space=vmem, size = 0x8000, scoped, tag = 'input window, operand 5, single buffered']
    #allocation8 [shape = 'u8[1024]{0}', space=vmem, size = 0x400, scoped, tag = 'output window, operand 0, single buffered']
    %12 = vsyncpa [#allocation3], 0
    %13 = vsyncpa [#allocation6], 0
    %14 = vsyncpa [#allocation4], 0
    // Predicated region
    $region2: #{tpu_custom_call.1} parent=1 // pred_check
      _
    $region3: #{tpu_custom_call.1} parent=1 // pred_check_branch
      %16 = sbr.rel (0) target = $region5
    $region4: #{tpu_custom_call.1} parent=1 // pred_region
      %s18 = ssub.s32 128, 128
      %19 = vsyncadd [#allocation3], %s18
      %s20 = sshll.u32 [#allocation2], 4
      %s21 = int_to_ptr.vmem [resolvable:$true] %s20
      %26 = dma.hbm_to_vmem [thread:$0]  %s0, 128, %s21, [#allocation3], 64, 64, 4
    $region5: #{tpu_custom_call.1} parent=1 // pred_fallthru
      _
    // Predicated region
    $region6: #{tpu_custom_call.1} parent=1 // pred_check
      _
    $region7: #{tpu_custom_call.1} parent=1 // pred_check_branch
      %28 = sbr.rel (0) target = $region9
    $region8: #{tpu_custom_call.1} parent=1 // pred_region
      _
    $region9: #{tpu_custom_call.1} parent=1 // pred_fallthru
      _
    // Predicated region
    $region10: #{tpu_custom_call.1} parent=1 // pred_check
      _
    $region11: #{tpu_custom_call.1} parent=1 // pred_check_branch
      %30 = sbr.rel (0) target = $region13
    $region12: #{tpu_custom_call.1} parent=1 // pred_region
      _
    $region13: #{tpu_custom_call.1} parent=1 // pred_fallthru
      _
    // Predicated region
    $region14: #{tpu_custom_call.1} parent=1 // pred_check
      _
    $region15: #{tpu_custom_call.1} parent=1 // pred_check_branch
      %32 = sbr.rel (0) target = $region17
    $region16: #{tpu_custom_call.1} parent=1 // pred_region
      _
    $region17: #{tpu_custom_call.1} parent=1 // pred_fallthru
      _
    // Predicated region
    $region18: #{tpu_custom_call.1} parent=1 // pred_check
      _
    $region19: #{tpu_custom_call.1} parent=1 // pred_check_branch
      %34 = sbr.rel (0) target = $region21
    $region20: #{tpu_custom_call.1} parent=1 // pred_region
      %s36 = ssub.s32 1024, 1024
      %37 = vsyncadd [#allocation6], %s36
      %s38 = sshll.u32 [#allocation5], 4
      %s39 = int_to_ptr.vmem [resolvable:$true] %s38
      %44 = dma.hbm_to_vmem [thread:$0]  %s4, 1024, %s39, [#allocation6], 64, 64, 4
    $region21: #{tpu_custom_call.1} parent=1 // pred_fallthru
      _
    // Predicated region
    $region22: #{tpu_custom_call.1} parent=1 // pred_check
      _
    $region23: #{tpu_custom_call.1} parent=1 // pred_check_branch
      %46 = sbr.rel (0) target = $region25
    $region24: #{tpu_custom_call.1} parent=1 // pred_region
      %s48 = ssub.s32 1024, 1024
      %49 = vsyncadd [#allocation6], %s48
      %s50 = sshll.u32 [#allocation7], 4
      %s51 = int_to_ptr.vmem [resolvable:$true] %s50
      %56 = dma.hbm_to_vmem [thread:$0]  %s5, 1024, %s51, [#allocation6], 64, 64, 4
    $region25: #{tpu_custom_call.1} parent=1 // pred_fallthru
      _
    // Predicated region
    $region26: #{tpu_custom_call.1} parent=1 // pred_check
      _
    $region27: #{tpu_custom_call.1} parent=1 // pred_check_branch
      %58 = sbr.rel (0) target = $region29
    $region28: #{tpu_custom_call.1} parent=1 // pred_region
      _
    $region29: #{tpu_custom_call.1} parent=1 // pred_fallthru
      _
    // Predicated region
    $region30: #{tpu_custom_call.1} parent=1 // pred_check
      _
    $region31: #{tpu_custom_call.1} parent=1 // pred_check_branch
      %60 = sbr.rel (0) target = $region33
    $region32: #{tpu_custom_call.1} parent=1 // pred_region
      %61 = dma.done [#allocation3], 128
    $region33: #{tpu_custom_call.1} parent=1 // pred_fallthru
      _
    // Predicated region
    $region34: #{tpu_custom_call.1} parent=1 // pred_check
      _
    $region35: #{tpu_custom_call.1} parent=1 // pred_check_branch
      %63 = sbr.rel (0) target = $region37
    $region36: #{tpu_custom_call.1} parent=1 // pred_region
      %64 = dma.done [#allocation6], 1024
    $region37: #{tpu_custom_call.1} parent=1 // pred_fallthru
      _
    // Predicated region
    $region38: #{tpu_custom_call.1} parent=1 // pred_check
      _
    $region39: #{tpu_custom_call.1} parent=1 // pred_check_branch
      %66 = sbr.rel (0) target = $region41
    $region40: #{tpu_custom_call.1} parent=1 // pred_region
      %67 = dma.done [#allocation6], 1024
    $region41: #{tpu_custom_call.1} parent=1 // pred_fallthru
      _
    %v69 = vld [vmem:[#allocation2] sm:$0xf]
    %v70 = vld [vmem:[#allocation2 + $0x4] sm:$0xf]
    %v71 = vld [vmem:[%s2] sm:$0x1]
    %v72 = vld [vmem:[%s2 + $0x1] sm:$0x1]
    %vm73 = vcmask 64512
    %v75 = vsel %vm73, %v71, 0
    %vm77 = vcmask 1043456
    %v79 = vsel %vm77, %v69, 0
    %81 = vmatprep.subr.bf16.mxu0 0
    %82 = vmatpush1.bf16.msra.mxu0 0
    %83 = vmatprep.subr.bf16.mxu0 0
    %84 = vmatpush1.bf16.msra.mxu0 0
    %85 = vmatprep.subr.bf16.mxu0 0
    %86 = vmatpush1.bf16.msra.mxu0 0
    %87 = vmatprep.subr.bf16.mxu0 0
    %88 = vmatpush1.bf16.msra.mxu0 0
    %89 = vmatprep.subr.bf16.mxu0 0
    %90 = vmatpush1.bf16.msra.mxu0 0
    %91 = vmatprep.subr.bf16.mxu0 0
    %92 = vmatpush1.bf16.msra.mxu0 0
    %93 = vmatprep.subr.bf16.mxu0 0
    %94 = vmatpush1.bf16.msra.mxu0 0
    %95 = vmatprep.subr.bf16.mxu0 0
    %96 = vmatpush1.bf16.msra.mxu0 %v79
    %97 = vmatprep.subr.bf16.mxu0 0
    %98 = vmatpush2.bf16.msra.mxu0 0
    %99 = vmatprep.subr.bf16.mxu0 0
    %100 = vmatpush2.bf16.msra.mxu0 0
    %101 = vmatprep.subr.bf16.mxu0 0
    %102 = vmatpush2.bf16.msra.mxu0 0
    %103 = vmatprep.subr.bf16.mxu0 0
    %104 = vmatpush2.bf16.msra.mxu0 0
    %105 = vmatprep.subr.bf16.mxu0 0
    %106 = vmatpush2.bf16.msra.mxu0 0
    %107 = vmatprep.subr.bf16.mxu0 0
    %108 = vmatpush2.bf16.msra.mxu0 0
    %109 = vmatprep.subr.bf16.mxu0 0
    %110 = vmatpush2.bf16.msra.mxu0 0
    %111 = vmatprep.subr.bf16.mxu0 0
    %112 = vmatpush2.bf16.msra.mxu0 0
    %113 = vmatprep.mubr.bf16.mxu0 0
    %114 = vmatmul.mubr.bf16.gmra.mxu0 %v75
    %v115 = vpop.f32.mrf.mxu0
    %v116 = vadd.f32 0.0, %v115
    %v117 = vpop.f32.mrf.mxu0
    %v118 = vpop.f32.mrf.mxu0
    %v119 = vpop.f32.mrf.mxu0
    %120 = vdwg.mxu0
    %v122 = vsel %vm73, %v72, 0
    %v125 = vsel %vm77, %v70, 0
    %127 = vmatprep.subr.bf16.mxu0 0
    %128 = vmatpush1.bf16.msra.mxu0 0
    %129 = vmatprep.subr.bf16.mxu0 0
    %130 = vmatpush1.bf16.msra.mxu0 0
    %131 = vmatprep.subr.bf16.mxu0 0
    %132 = vmatpush1.bf16.msra.mxu0 0
    %133 = vmatprep.subr.bf16.mxu0 0
    %134 = vmatpush1.bf16.msra.mxu0 0
    %135 = vmatprep.subr.bf16.mxu0 0
    %136 = vmatpush1.bf16.msra.mxu0 0
    %137 = vmatprep.subr.bf16.mxu0 0
    %138 = vmatpush1.bf16.msra.mxu0 0
    %139 = vmatprep.subr.bf16.mxu0 0
    %140 = vmatpush1.bf16.msra.mxu0 0
    %141 = vmatprep.subr.bf16.mxu0 0
    %142 = vmatpush1.bf16.msra.mxu0 %v125
    %143 = vmatprep.subr.bf16.mxu0 0
    %144 = vmatpush2.bf16.msra.mxu0 0
    %145 = vmatprep.subr.bf16.mxu0 0
    %146 = vmatpush2.bf16.msra.mxu0 0
    %147 = vmatprep.subr.bf16.mxu0 0
    %148 = vmatpush2.bf16.msra.mxu0 0
    %149 = vmatprep.subr.bf16.mxu0 0
    %150 = vmatpush2.bf16.msra.mxu0 0
    %151 = vmatprep.subr.bf16.mxu0 0
    %152 = vmatpush2.bf16.msra.mxu0 0
    %153 = vmatprep.subr.bf16.mxu0 0
    %154 = vmatpush2.bf16.msra.mxu0 0
    %155 = vmatprep.subr.bf16.mxu0 0
    %156 = vmatpush2.bf16.msra.mxu0 0
    %157 = vmatprep.subr.bf16.mxu0 0
    %158 = vmatpush2.bf16.msra.mxu0 0
    %159 = vmatprep.mubr.bf16.mxu0 0
    %160 = vmatmul.mubr.bf16.gmra.mxu0 %v122
    %v161 = vpop.f32.mrf.mxu0
    %v162 = vadd.f32 0.0, %v161
    %v163 = vpop.f32.mrf.mxu0
    %v164 = vpop.f32.mrf.mxu0
    %v165 = vpop.f32.mrf.mxu0
    %166 = vdwg.mxu0
    %v167 = vld [vmem:[%s3] sm:$0x3]
    %v168 = vrsqrt.pop %v167
    %170 = vset.pattern.permute.xlu0 0
    %171 = vperm.xlu0 %170, %v168
    %v172 = vpop.permute.xlu0 %171
    %v173 = vrot.slane %v172, 1
    %v176 = vmul.f32 %v116, %v172
    %v177 = vmul.f32 %v162, %v173
    %v178 = vpack.c.bf16 %v176, %v176
    %v179 = vpack.c.bf16 %v177, %v177
    %v180 = vld [vmem:[#allocation5] sm:$0xf]
    %v181 = vld [vmem:[#allocation5 + $0x4] sm:$0xf]
    %v182 = vld [vmem:[#allocation5 + $0x8] sm:$0xf]
    %v183 = vld [vmem:[#allocation5 + $0xc] sm:$0xf]
    %v184 = vld [vmem:[#allocation5 + $0x10] sm:$0xf]
    %v185 = vld [vmem:[#allocation5 + $0x14] sm:$0xf]
    %v186 = vld [vmem:[#allocation5 + $0x18] sm:$0xf]
    %v187 = vld [vmem:[#allocation5 + $0x1c] sm:$0xf]
    %v188 = vld [vmem:[#allocation5 + $0x20] sm:$0xf]
    %v189 = vld [vmem:[#allocation5 + $0x24] sm:$0xf]
    %v190 = vld [vmem:[#allocation5 + $0x28] sm:$0xf]
    %v191 = vld [vmem:[#allocation5 + $0x2c] sm:$0xf]
    %v192 = vld [vmem:[#allocation5 + $0x30] sm:$0xf]
    %v193 = vld [vmem:[#allocation5 + $0x34] sm:$0xf]
    %v194 = vld [vmem:[#allocation5 + $0x38] sm:$0xf]
    %v195 = vld [vmem:[#allocation5 + $0x3c] sm:$0xf]
    %v196 = vld [vmem:[%s1] sm:$0x1]
    %v197 = vld [vmem:[#allocation7] sm:$0xf]
    %v198 = vld [vmem:[#allocation7 + $0x4] sm:$0xf]
    %v199 = vld [vmem:[#allocation7 + $0x8] sm:$0xf]
    %v200 = vld [vmem:[#allocation7 + $0xc] sm:$0xf]
    %v201 = vld [vmem:[#allocation7 + $0x10] sm:$0xf]
    %v202 = vld [vmem:[#allocation7 + $0x14] sm:$0xf]
    %v203 = vld [vmem:[#allocation7 + $0x18] sm:$0xf]
    %v204 = vld [vmem:[#allocation7 + $0x1c] sm:$0xf]
    %v205 = vld [vmem:[#allocation7 + $0x20] sm:$0xf]
    %v206 = vld [vmem:[#allocation7 + $0x24] sm:$0xf]
    %v207 = vld [vmem:[#allocation7 + $0x28] sm:$0xf]
    %v208 = vld [vmem:[#allocation7 + $0x2c] sm:$0xf]
    %v209 = vld [vmem:[#allocation7 + $0x30] sm:$0xf]
    %v210 = vld [vmem:[#allocation7 + $0x34] sm:$0xf]
    %v211 = vld [vmem:[#allocation7 + $0x38] sm:$0xf]
    %v212 = vld [vmem:[#allocation7 + $0x3c] sm:$0xf]
    %v229 = vunpack.c.l.b16 %v197
    %v230 = vunpack.c.l.b16 %v198
    %v231 = vunpack.c.l.b16 %v199
    %v232 = vunpack.c.l.b16 %v200
    %v233 = vunpack.c.l.b16 %v201
    %v234 = vunpack.c.l.b16 %v202
    %v235 = vunpack.c.l.b16 %v203
    %v236 = vunpack.c.l.b16 %v204
    %v237 = vunpack.c.l.b16 %v205
    %v238 = vunpack.c.l.b16 %v206
    %v239 = vunpack.c.l.b16 %v207
    %v240 = vunpack.c.l.b16 %v208
    %v241 = vunpack.c.l.b16 %v209
    %v242 = vunpack.c.l.b16 %v210
    %v243 = vunpack.c.l.b16 %v211
    %v244 = vunpack.c.l.b16 %v212
    %v245 = vpack.c.b16 %v230, %v229
    %v246 = vpack.c.b16 %v232, %v231
    %v247 = vpack.c.b16 %v234, %v233
    %v248 = vpack.c.b16 %v236, %v235
    %v249 = vpack.c.b16 %v238, %v237
    %v250 = vpack.c.b16 %v240, %v239
    %v251 = vpack.c.b16 %v242, %v241
    %v252 = vpack.c.b16 %v244, %v243
    %261 = vmatprep.subr.bf16.mxu0 0
    %262 = vmatpush1.bf16.msra.mxu0 %v252
    %263 = vmatprep.subr.bf16.mxu0 0
    %264 = vmatpush1.bf16.msra.mxu0 %v251
    %265 = vmatprep.subr.bf16.mxu0 0
    %266 = vmatpush1.bf16.msra.mxu0 %v250
    %267 = vmatprep.subr.bf16.mxu0 0
    %268 = vmatpush1.bf16.msra.mxu0 %v249
    %269 = vmatprep.subr.bf16.mxu0 0
    %270 = vmatpush1.bf16.msra.mxu0 %v248
    %271 = vmatprep.subr.bf16.mxu0 0
    %272 = vmatpush1.bf16.msra.mxu0 %v247
    %273 = vmatprep.subr.bf16.mxu0 0
    %274 = vmatpush1.bf16.msra.mxu0 %v246
    %275 = vmatprep.subr.bf16.mxu0 0
    %276 = vmatpush1.bf16.msra.mxu0 %v245
    %277 = vmatprep.subr.bf16.mxu0 0
    %278 = vmatpush2.bf16.msra.mxu0 0
    %279 = vmatprep.subr.bf16.mxu0 0
    %280 = vmatpush2.bf16.msra.mxu0 0
    %281 = vmatprep.subr.bf16.mxu0 0
    %282 = vmatpush2.bf16.msra.mxu0 0
    %283 = vmatprep.subr.bf16.mxu0 0
    %284 = vmatpush2.bf16.msra.mxu0 0
    %285 = vmatprep.subr.bf16.mxu0 0
    %286 = vmatpush2.bf16.msra.mxu0 0
    %287 = vmatprep.subr.bf16.mxu0 0
    %288 = vmatpush2.bf16.msra.mxu0 0
    %289 = vmatprep.subr.bf16.mxu0 0
    %290 = vmatpush2.bf16.msra.mxu0 0
    %291 = vmatprep.subr.bf16.mxu0 0
    %292 = vmatpush2.bf16.msra.mxu0 0
    %293 = vmatprep.mubr.bf16.mxu0 0
    %294 = vmatmul.mubr.bf16.gmra.mxu0 %v196
    %v295 = vpop.f32.mrf.mxu0
    %v296 = vadd.f32 0.0, %v295
    %v297 = vpop.f32.mrf.mxu0
    %v298 = vpop.f32.mrf.mxu0
    %v299 = vpop.f32.mrf.mxu0
    %300 = vdwg.mxu0
    %v303 = vunpack.c.l.b16 %v178
    %v304 = vunpack.c.l.b16 %v179
    %v305 = vrot.slane %v304, 7
    %vm306 = vcmask 1041409
    %v307 = vsel %vm306, %v305, %v303
    %v308 = vpack.c.b16 %v307, %v307
    %v326 = vunpack.c.l.b16 %v180
    %v327 = vunpack.c.l.b16 %v181
    %v328 = vunpack.c.l.b16 %v182
    %v329 = vunpack.c.l.b16 %v183
    %v330 = vunpack.c.l.b16 %v184
    %v331 = vunpack.c.l.b16 %v185
    %v332 = vunpack.c.l.b16 %v186
    %v333 = vunpack.c.l.b16 %v187
    %v334 = vunpack.c.l.b16 %v188
    %v335 = vunpack.c.l.b16 %v189
    %v336 = vunpack.c.l.b16 %v190
    %v337 = vunpack.c.l.b16 %v191
    %v338 = vunpack.c.l.b16 %v192
    %v339 = vunpack.c.l.b16 %v193
    %v340 = vunpack.c.l.b16 %v194
    %v341 = vunpack.c.l.b16 %v195
    %v342 = vpack.c.b16 %v327, %v326
    %v343 = vpack.c.b16 %v329, %v328
    %v344 = vpack.c.b16 %v331, %v330
    %v345 = vpack.c.b16 %v333, %v332
    %v346 = vpack.c.b16 %v335, %v334
    %v347 = vpack.c.b16 %v337, %v336
    %v348 = vpack.c.b16 %v339, %v338
    %v349 = vpack.c.b16 %v341, %v340
    %358 = vmatprep.subr.bf16.mxu0 0
    %359 = vmatpush1.bf16.msra.mxu0 %v349
    %360 = vmatprep.subr.bf16.mxu0 0
    %361 = vmatpush1.bf16.msra.mxu0 %v348
    %362 = vmatprep.subr.bf16.mxu0 0
    %363 = vmatpush1.bf16.msra.mxu0 %v347
    %364 = vmatprep.subr.bf16.mxu0 0
    %365 = vmatpush1.bf16.msra.mxu0 %v346
    %366 = vmatprep.subr.bf16.mxu0 0
    %367 = vmatpush1.bf16.msra.mxu0 %v345
    %368 = vmatprep.subr.bf16.mxu0 0
    %369 = vmatpush1.bf16.msra.mxu0 %v344
    %370 = vmatprep.subr.bf16.mxu0 0
    %371 = vmatpush1.bf16.msra.mxu0 %v343
    %372 = vmatprep.subr.bf16.mxu0 0
    %373 = vmatpush1.bf16.msra.mxu0 %v342
    %374 = vmatprep.subr.bf16.mxu0 0
    %375 = vmatpush2.bf16.msra.mxu0 0
    %376 = vmatprep.subr.bf16.mxu0 0
    %377 = vmatpush2.bf16.msra.mxu0 0
    %378 = vmatprep.subr.bf16.mxu0 0
    %379 = vmatpush2.bf16.msra.mxu0 0
    %380 = vmatprep.subr.bf16.mxu0 0
    %381 = vmatpush2.bf16.msra.mxu0 0
    %382 = vmatprep.subr.bf16.mxu0 0
    %383 = vmatpush2.bf16.msra.mxu0 0
    %384 = vmatprep.subr.bf16.mxu0 0
    %385 = vmatpush2.bf16.msra.mxu0 0
    %386 = vmatprep.subr.bf16.mxu0 0
    %387 = vmatpush2.bf16.msra.mxu0 0
    %388 = vmatprep.subr.bf16.mxu0 0
    %389 = vmatpush2.bf16.msra.mxu0 0
    %390 = vmatprep.mubr.bf16.mxu0 0
    %391 = vmatmul.mubr.bf16.gmra.mxu0 %v308
    %v392 = vpop.f32.mrf.mxu0
    %v393 = vadd.f32 %v296, %v392
    %v394 = vpop.f32.mrf.mxu0
    %v395 = vpop.f32.mrf.mxu0
    %v396 = vpop.f32.mrf.mxu0
    %397 = vdwg.mxu0
    %v398 = vld [vmem:[%s6] sm:$0x1]
    %v399 = vunpack.c.l.bf16 %v398
    %v400 = vlaneseq
    %v401 = vshrl.u32 %v400, 7
    %v402 = vsub.s32 0, %v401
    %v403 = vrot.slane %v399, %v402
    %v404 = vadd.f32 %v393, %v403
    %405 = vst [vmem:[#allocation8] sm:$0x3] %v404
    // Predicated region
    $region42: #{tpu_custom_call.1} parent=1 // pred_check
      _
    $region43: #{tpu_custom_call.1} parent=1 // pred_check_branch
      %407 = sbr.rel (0) target = $region45
    $region44: #{tpu_custom_call.1} parent=1 // pred_region
      %s409 = ssub.s32 32, 32
      %410 = vsyncadd [#allocation4], %s409
      %s412 = sshll.u32 [#allocation8], 4
      %s413 = int_to_ptr.vmem [resolvable:$true] %s412
      %415 = dma.vmem_to_hbm [thread:$0]  %s413, 32, %s7, [#allocation4]
    $region45: #{tpu_custom_call.1} parent=1 // pred_fallthru
      _
    // Predicated region
    $region46: #{tpu_custom_call.1} parent=1 // pred_check
      _
    $region47: #{tpu_custom_call.1} parent=1 // pred_check_branch
      %417 = sbr.rel (0) target = $region49
    $region48: #{tpu_custom_call.1} parent=1 // pred_region
      %418 = dma.done [#allocation4], 32
    $region49: #{tpu_custom_call.1} parent=1 // pred_fallthru
      _
    %419 = vsyncpa [#allocation3], 1
    %420 = vsyncpa [#allocation6], 1
    %421 = vsyncpa [#allocation4], 1

</llo_original>
